<compile_context>
chip_gen: v7x
topology: tpu7x:2x2x1
jax: 0.10.0
libtpu: 0.0.40
codegen_flags: <defaults>
</compile_context>

<pallas_src>
import functools

import numpy as np
import jax
import jax.numpy as jnp
from jax.experimental import pallas as pl
from jax.experimental.pallas import tpu as pltpu


# -----------------------------------------------------------------------------
# Bilinear interpolation (align_corners=False) expressed as  Wh @ x @ Ww^T
# -----------------------------------------------------------------------------
def _interp_matrix(out_size: int, in_size: int) -> np.ndarray:
    """Interpolation matrix matching F.interpolate(mode='bilinear', align_corners=False)."""
    ratio = in_size / out_size
    W = np.zeros((out_size, in_size), dtype=np.float32)
    for o in range(out_size):
        src = ratio * (o + 0.5) - 0.5
        src = max(src, 0.0)                      # PyTorch clamps negative source coords
        i0 = min(int(np.floor(src)), in_size - 1)
        i1 = min(i0 + 1, in_size - 1)
        l1 = src - i0
        W[o, i0] += 1.0 - l1
        W[o, i1] += l1
    return W


def _round_up(x: int, m: int) -> int:
    return (x + m - 1) // m * m


# -----------------------------------------------------------------------------
# Fused kernel: per-batch width interp (once) + row-tile height interp + masked CE
# -----------------------------------------------------------------------------
def _fused_linear_loss_kernel(x_ref, wh_ref, wwt_ref, lab_ref,
                              sum_ref, cnt_ref, s1_ref,
                              *, n_classes, feat_h, out_h):
    # x_ref  : (1, C*h, w)    low-res logits for batch b (all classes)
    # wh_ref : (TH, h)        row-interpolation weights for this row tile
    # wwt_ref: (w, Wp)        column-interpolation weights (transposed, W padded to 128)
    # lab_ref: (1, TH, Wp)    int8/int32 labels for this row tile
    # sum_ref/cnt_ref: (1,1,1) per-batch partial loss sum / valid-pixel count
    # s1_ref : (C*h, Wp)      persistent VMEM scratch holding x @ Ww^T for batch b
    i = pl.program_id(1)
    tile_h = wh_ref.shape[0]

    @pl.when(i == 0)
    def _per_batch_init():
        # Stage 1: width interpolation for ALL channels, once per batch.
        s1_ref[...] = jnp.dot(x_ref[0].astype(jnp.float32), wwt_ref[...],
                              preferred_element_type=jnp.float32)
        sum_ref[...] = jnp.zeros_like(sum_ref)
        cnt_ref[...] = jnp.zeros_like(cnt_ref)

    wh = wh_ref[...]                               # (TH, h)
    lab = lab_ref[0].astype(jnp.int32)             # (TH, Wp)
    out_w = lab.shape[1]

    def stage2(c):
        # Height interpolation for class c on this row tile: (TH, h) @ (h, Wp).
        return jnp.dot(wh, s1_ref[c * feat_h:(c + 1) * feat_h, :],
                       preferred_element_type=jnp.float32)

    # Pass 1: running max + true-class logit (no exp).
    m = jnp.full((tile_h, out_w), -jnp.inf, jnp.float32)
    picked = jnp.zeros((tile_h, out_w), jnp.float32)
    for c in range(n_classes):                     # static, small
        lc = stage2(c)
        m = jnp.maximum(m, lc)
        picked = picked + jnp.where(lab == c, lc, 0.0)

    # Pass 2: softmax denominator — exactly one exp per class per pixel.
    den = jnp.zeros((tile_h, out_w), jnp.float32)
    for c in range(n_classes):
        den = den + jnp.exp(stage2(c) - m)

    lse = m + jnp.log(den)                         # (TH, Wp)

    # Validity mask: STEGO semantics keep only labels in [0, n_classes); also
    # gate rows past H (last row tile) and the padded W columns (label = -1).
    valid = (lab >= 0) & (lab < n_classes)
    row = jax.lax.broadcasted_iota(jnp.int32, lab.shape, 0) + i * tile_h
    valid = valid & (row < out_h)

    # Keep this a select (not an arithmetic mask): garbage rows of the padded
    # wh/label blocks may contain NaN/Inf which must not leak into the sum.
    loss = jnp.where(valid, lse - picked, 0.0)
    sum_ref[...] += jnp.sum(loss)
    cnt_ref[...] += jnp.sum(valid.astype(jnp.float32))


# -----------------------------------------------------------------------------
# Full LinearLoss.forward
# -----------------------------------------------------------------------------
def linear_loss(linear_logits, label, n_classes):
    B, C, h, w = map(int, linear_logits.shape)
    assert C == n_classes
    H, W = int(label.shape[-2]), int(label.shape[-1])
    Wp = _round_up(W, 128)

    wh = jnp.asarray(_interp_matrix(H, h))                       # (H, h)
    wwt_np = np.zeros((w, Wp), np.float32)
    wwt_np[:, :W] = _interp_matrix(W, w).T
    wwt = jnp.asarray(wwt_np)                                    # (w, Wp)

    # Free reshape (row-major): channels folded into the sublane axis so the
    # width-interp matmul is batched over all classes in one shot.
    x_r = linear_logits.astype(jnp.float32).reshape(B, C * h, w)

    # Labels: int8 when possible (4x less HBM traffic for the only H*W stream).
    # Clip first so out-of-range values cannot wrap into a valid class id.
    labels = label.reshape(B, H, W)
    if n_classes <= 127:
        labels = jnp.clip(labels, -1, n_classes).astype(jnp.int8)
    else:
        labels = labels.astype(jnp.int32)
    if Wp != W:
        labels = jnp.pad(labels, ((0, 0), (0, 0), (0, Wp - W)),
                         constant_values=-1)
    lab_bytes = labels.dtype.itemsize

    # Row tile: full H when it fits, else 512 (multiple of 32 for int8 tiling);
    # the in-kernel `row < H` mask handles the ragged tail.
    TH = H if H <= 512 else 512
    n_row_tiles = pl.cdiv(H, TH)

    # Explicit scoped-VMEM budget: double-buffered input blocks + s1 scratch +
    # generous allowance for (TH, Wp) f32 temporaries, with headroom.
    need = (2 * (C * h * w * 4 + w * Wp * 4 + TH * h * 4 + TH * Wp * lab_bytes)
            + C * h * Wp * 4 + 8 * TH * Wp * 4)
    vmem_limit = int(min(max(need + (8 << 20), 32 << 20), 64 << 20))

    kernel = functools.partial(_fused_linear_loss_kernel,
                               n_classes=n_classes, feat_h=h, out_h=H)

    sums, cnts = pl.pallas_call(
        kernel,
        out_shape=(jax.ShapeDtypeStruct((B, 1, 1), jnp.float32),
                   jax.ShapeDtypeStruct((B, 1, 1), jnp.float32)),
        grid=(B, n_row_tiles),
        in_specs=[
            pl.BlockSpec((1, C * h, w), lambda b, i: (b, 0, 0)),   # resident per b
            pl.BlockSpec((TH, h), lambda b, i: (i, 0)),
            pl.BlockSpec((w, Wp), lambda b, i: (0, 0)),            # resident always
            pl.BlockSpec((1, TH, Wp), lambda b, i: (b, i, 0)),
        ],
        out_specs=(pl.BlockSpec((1, 1, 1), lambda b, i: (b, 0, 0)),
                   pl.BlockSpec((1, 1, 1), lambda b, i: (b, 0, 0))),
        scratch_shapes=[pltpu.VMEM((C * h, Wp), jnp.float32)],     # per-batch s1
        compiler_params=pltpu.CompilerParams(
            dimension_semantics=("parallel", "arbitrary"),
            vmem_limit_bytes=vmem_limit),
    )(x_r, wh, wwt, labels)

    # CrossEntropyLoss reduction='mean' over valid pixels; .mean() on a scalar
    # is a no-op.  If no pixel is valid this divides by zero (NaN), matching
    # the reference behaviour of mean over an empty selection.
    # TODO(synk): torch.nn.CrossEntropyLoss would raise on labels >= n_classes
    # (it only skips ignore_index); STEGO's explicit mask keeps them out of the
    # loss, which is what is implemented here.
    return jnp.sum(sums) / jnp.sum(cnts)


if __name__ == "__main__":
    key = jax.random.PRNGKey(0)
    B, n_classes, h, w = 2, 4, 8, 8
    H, W = 16, 16

    k1, k2 = jax.random.split(key)
    linear_logits = jax.random.normal(k1, (B, n_classes, h, w), jnp.float32)
    # labels in [-1, n_classes) so the validity mask is exercised
    label = jax.random.randint(k2, (B, H, W), -1, n_classes, dtype=jnp.int32)

    loss = linear_loss(linear_logits, label, n_classes)
    loss = jax.block_until_ready(loss)

    # pure-JAX reference (same interpolation matrices; checks kernel math)
    wh = jnp.asarray(_interp_matrix(H, h))
    ww = jnp.asarray(_interp_matrix(W, w))
    up_ref = jnp.einsum('Hh,bchw,Ww->bcHW', wh, linear_logits, ww)
    lg = jnp.transpose(up_ref, (0, 2, 3, 1)).reshape(-1, n_classes)
    fl = label.reshape(-1)
    mask = (fl >= 0) & (fl < n_classes)
    logp = jax.nn.log_softmax(lg, axis=-1)
    nll = -jnp.take_along_axis(logp, jnp.maximum(fl, 0)[:, None], axis=-1)[:, 0]
    ref = jnp.sum(jnp.where(mask, nll, 0.0)) / jnp.sum(mask)

    assert jnp.allclose(loss, ref, rtol=1e-5, atol=1e-5), (float(loss), float(ref))
    print("KERNEL_OK")
</pallas_src>

<mosaic_0001>
module attributes {stable_mosaic.version = 11 : i64} {
  func.func @_fused_linear_loss_kernel(%arg0: i32, %arg1: i32, %arg2: memref<1x32x8xf32, #tpu.memory_space<vmem>>, %arg3: memref<16x8xf32, #tpu.memory_space<vmem>>, %arg4: memref<8x128xf32, #tpu.memory_space<vmem>>, %arg5: memref<1x16x128xi8, #tpu.memory_space<vmem>>, %arg6: memref<1x1x1xf32, #tpu.memory_space<vmem>>, %arg7: memref<1x1x1xf32, #tpu.memory_space<vmem>>, %arg8: memref<32x128xf32, #tpu.memory_space<vmem>>) attributes {dimension_semantics = [#tpu.dimension_semantics<parallel>, #tpu.dimension_semantics<arbitrary>], iteration_bounds = array<i64: 2, 1>, scalar_prefetch = 0 : i64, scratch_operands = 1 : i64, tpu.core_type = #tpu.core_type<tc>, window_params = [{transform_indices = @transform_0, window_bounds = array<i64: 1, 32, 8>}, {transform_indices = @transform_1, window_bounds = array<i64: 16, 8>}, {pipeline_mode = #tpu.pipeline_mode<synchronous>, transform_indices = @transform_2, window_bounds = array<i64: 8, 128>}, {transform_indices = @transform_3, window_bounds = array<i64: 1, 16, 128>}, {transform_indices = @transform_4, window_bounds = array<i64: 1, 1, 1>}, {transform_indices = @transform_5, window_bounds = array<i64: 1, 1, 1>}]} {
    %c0_i32 = arith.constant 0 : i32
    %0 = arith.cmpi eq, %arg1, %c0_i32 : i32
    %1 = arith.extui %0 : i1 to i32
    %c0_i32_0 = arith.constant 0 : i32
    %2 = arith.cmpi ne, %1, %c0_i32_0 : i32
    scf.if %2 {
      %c0_50 = arith.constant 0 : index
      %c0_51 = arith.constant 0 : index
      %c0_52 = arith.constant 0 : index
      %97 = vector.load %arg2[%c0_50, %c0_51, %c0_52] : memref<1x32x8xf32, #tpu.memory_space<vmem>>, vector<1x32x8xf32>
      %98 = vector.shape_cast %97 : vector<1x32x8xf32> to vector<32x8xf32>
      %c0_53 = arith.constant 0 : index
      %c0_54 = arith.constant 0 : index
      %99 = vector.load %arg4[%c0_53, %c0_54] : memref<8x128xf32, #tpu.memory_space<vmem>>, vector<8x128xf32>
      %cst_55 = arith.constant dense<0.000000e+00> : vector<32x128xf32>
      %100 = tpu.matmul %98, %99, %cst_55 {dimension_numbers = #tpu.dot_dimension_numbers<[1], [0], [0], [1], [0, 0, 1, 1], [], []>} : vector<32x8xf32>, vector<8x128xf32>, vector<32x128xf32> -> vector<32x128xf32>
      %c0_56 = arith.constant 0 : index
      %c0_57 = arith.constant 0 : index
      %101 = vector.load %arg8[%c0_56, %c0_57] : memref<32x128xf32, #tpu.memory_space<vmem>>, vector<32x128xf32>
      tpu.vector_store %arg8[%c0_56, %c0_57], %100 {strides = array<i32>} : memref<32x128xf32, #tpu.memory_space<vmem>>, vector<32x128xf32>,
      %cst_58 = arith.constant 0.000000e+00 : f32
      %102 = vector.broadcast %cst_58 : f32 to vector<1x1x1xf32>
      %c0_59 = arith.constant 0 : index
      %c0_60 = arith.constant 0 : index
      %c0_61 = arith.constant 0 : index
      %103 = vector.load %arg6[%c0_59, %c0_60, %c0_61] : memref<1x1x1xf32, #tpu.memory_space<vmem>>, vector<1x1x1xf32>
      tpu.vector_store %arg6[%c0_59, %c0_60, %c0_61], %102 {strides = array<i32>} : memref<1x1x1xf32, #tpu.memory_space<vmem>>, vector<1x1x1xf32>,
      %cst_62 = arith.constant 0.000000e+00 : f32
      %104 = vector.broadcast %cst_62 : f32 to vector<1x1x1xf32>
      %c0_63 = arith.constant 0 : index
      %c0_64 = arith.constant 0 : index
      %c0_65 = arith.constant 0 : index
      %105 = vector.load %arg7[%c0_63, %c0_64, %c0_65] : memref<1x1x1xf32, #tpu.memory_space<vmem>>, vector<1x1x1xf32>
      tpu.vector_store %arg7[%c0_63, %c0_64, %c0_65], %104 {strides = array<i32>} : memref<1x1x1xf32, #tpu.memory_space<vmem>>, vector<1x1x1xf32>,
    } else {
    }
    %c0 = arith.constant 0 : index
    %c0_1 = arith.constant 0 : index
    %3 = vector.load %arg3[%c0, %c0_1] : memref<16x8xf32, #tpu.memory_space<vmem>>, vector<16x8xf32>
    %c0_2 = arith.constant 0 : index
    %c0_3 = arith.constant 0 : index
    %c0_4 = arith.constant 0 : index
    %4 = vector.load %arg5[%c0_2, %c0_3, %c0_4] : memref<1x16x128xi8, #tpu.memory_space<vmem>>, vector<1x16x128xi8>
    %5 = vector.shape_cast %4 : vector<1x16x128xi8> to vector<16x128xi8>
    %6 = arith.extsi %5 : vector<16x128xi8> to vector<16x128xi32>
    %cst = arith.constant 0xFF800000 : f32
    %7 = vector.broadcast %cst : f32 to vector<16x128xf32>
    %cst_5 = arith.constant 0.000000e+00 : f32
    %8 = vector.broadcast %cst_5 : f32 to vector<16x128xf32>
    %c0_6 = arith.constant 0 : index
    %c0_7 = arith.constant 0 : index
    %9 = vector.load %arg8[%c0_6, %c0_7] : memref<32x128xf32, #tpu.memory_space<vmem>>, vector<8x128xf32>
    %cst_8 = arith.constant dense<0.000000e+00> : vector<16x128xf32>
    %10 = tpu.matmul %3, %9, %cst_8 {dimension_numbers = #tpu.dot_dimension_numbers<[1], [0], [0], [1], [0, 0, 1, 1], [], []>} : vector<16x8xf32>, vector<8x128xf32>, vector<16x128xf32> -> vector<16x128xf32>
    %11 = arith.maximumf %7, %10 : vector<16x128xf32>
    %c0_i32_9 = arith.constant 0 : i32
    %12 = vector.broadcast %c0_i32_9 : i32 to vector<16x128xi32>
    %13 = arith.cmpi eq, %6, %12 : vector<16x128xi32>
    %cst_10 = arith.constant 0.000000e+00 : f32
    %14 = vector.broadcast %cst_10 : f32 to vector<16x128xf32>
    %15 = arith.select %13, %10, %14 : vector<16x128xi1>, vector<16x128xf32>
    %16 = arith.addf %8, %15 : vector<16x128xf32>
    %c8 = arith.constant 8 : index
    %c0_11 = arith.constant 0 : index
    %17 = vector.load %arg8[%c8, %c0_11] : memref<32x128xf32, #tpu.memory_space<vmem>>, vector<8x128xf32>
    %cst_12 = arith.constant dense<0.000000e+00> : vector<16x128xf32>
    %18 = tpu.matmul %3, %17, %cst_12 {dimension_numbers = #tpu.dot_dimension_numbers<[1], [0], [0], [1], [0, 0, 1, 1], [], []>} : vector<16x8xf32>, vector<8x128xf32>, vector<16x128xf32> -> vector<16x128xf32>
    %19 = arith.maximumf %11, %18 : vector<16x128xf32>
    %c1_i32 = arith.constant 1 : i32
    %20 = vector.broadcast %c1_i32 : i32 to vector<16x128xi32>
    %21 = arith.cmpi eq, %6, %20 : vector<16x128xi32>
    %cst_13 = arith.constant 0.000000e+00 : f32
    %22 = vector.broadcast %cst_13 : f32 to vector<16x128xf32>
    %23 = arith.select %21, %18, %22 : vector<16x128xi1>, vector<16x128xf32>
    %24 = arith.addf %16, %23 : vector<16x128xf32>
    %c16 = arith.constant 16 : index
    %c0_14 = arith.constant 0 : index
    %25 = vector.load %arg8[%c16, %c0_14] : memref<32x128xf32, #tpu.memory_space<vmem>>, vector<8x128xf32>
    %cst_15 = arith.constant dense<0.000000e+00> : vector<16x128xf32>
    %26 = tpu.matmul %3, %25, %cst_15 {dimension_numbers = #tpu.dot_dimension_numbers<[1], [0], [0], [1], [0, 0, 1, 1], [], []>} : vector<16x8xf32>, vector<8x128xf32>, vector<16x128xf32> -> vector<16x128xf32>
    %27 = arith.maximumf %19, %26 : vector<16x128xf32>
    %c2_i32 = arith.constant 2 : i32
    %28 = vector.broadcast %c2_i32 : i32 to vector<16x128xi32>
    %29 = arith.cmpi eq, %6, %28 : vector<16x128xi32>
    %cst_16 = arith.constant 0.000000e+00 : f32
    %30 = vector.broadcast %cst_16 : f32 to vector<16x128xf32>
    %31 = arith.select %29, %26, %30 : vector<16x128xi1>, vector<16x128xf32>
    %32 = arith.addf %24, %31 : vector<16x128xf32>
    %c24 = arith.constant 24 : index
    %c0_17 = arith.constant 0 : index
    %33 = vector.load %arg8[%c24, %c0_17] : memref<32x128xf32, #tpu.memory_space<vmem>>, vector<8x128xf32>
    %cst_18 = arith.constant dense<0.000000e+00> : vector<16x128xf32>
    %34 = tpu.matmul %3, %33, %cst_18 {dimension_numbers = #tpu.dot_dimension_numbers<[1], [0], [0], [1], [0, 0, 1, 1], [], []>} : vector<16x8xf32>, vector<8x128xf32>, vector<16x128xf32> -> vector<16x128xf32>
    %35 = arith.maximumf %27, %34 : vector<16x128xf32>
    %c3_i32 = arith.constant 3 : i32
    %36 = vector.broadcast %c3_i32 : i32 to vector<16x128xi32>
    %37 = arith.cmpi eq, %6, %36 : vector<16x128xi32>
    %cst_19 = arith.constant 0.000000e+00 : f32
    %38 = vector.broadcast %cst_19 : f32 to vector<16x128xf32>
    %39 = arith.select %37, %34, %38 : vector<16x128xi1>, vector<16x128xf32>
    %40 = arith.addf %32, %39 : vector<16x128xf32>
    %cst_20 = arith.constant 0.000000e+00 : f32
    %41 = vector.broadcast %cst_20 : f32 to vector<16x128xf32>
    %c0_21 = arith.constant 0 : index
    %c0_22 = arith.constant 0 : index
    %42 = vector.load %arg8[%c0_21, %c0_22] : memref<32x128xf32, #tpu.memory_space<vmem>>, vector<8x128xf32>
    %cst_23 = arith.constant dense<0.000000e+00> : vector<16x128xf32>
    %43 = tpu.matmul %3, %42, %cst_23 {dimension_numbers = #tpu.dot_dimension_numbers<[1], [0], [0], [1], [0, 0, 1, 1], [], []>} : vector<16x8xf32>, vector<8x128xf32>, vector<16x128xf32> -> vector<16x128xf32>
    %44 = arith.subf %43, %35 : vector<16x128xf32>
    %45 = math.exp %44 : vector<16x128xf32>
    %46 = arith.addf %41, %45 : vector<16x128xf32>
    %c8_24 = arith.constant 8 : index
    %c0_25 = arith.constant 0 : index
    %47 = vector.load %arg8[%c8_24, %c0_25] : memref<32x128xf32, #tpu.memory_space<vmem>>, vector<8x128xf32>
    %cst_26 = arith.constant dense<0.000000e+00> : vector<16x128xf32>
    %48 = tpu.matmul %3, %47, %cst_26 {dimension_numbers = #tpu.dot_dimension_numbers<[1], [0], [0], [1], [0, 0, 1, 1], [], []>} : vector<16x8xf32>, vector<8x128xf32>, vector<16x128xf32> -> vector<16x128xf32>
    %49 = arith.subf %48, %35 : vector<16x128xf32>
    %50 = math.exp %49 : vector<16x128xf32>
    %51 = arith.addf %46, %50 : vector<16x128xf32>
    %c16_27 = arith.constant 16 : index
    %c0_28 = arith.constant 0 : index
    %52 = vector.load %arg8[%c16_27, %c0_28] : memref<32x128xf32, #tpu.memory_space<vmem>>, vector<8x128xf32>
    %cst_29 = arith.constant dense<0.000000e+00> : vector<16x128xf32>
    %53 = tpu.matmul %3, %52, %cst_29 {dimension_numbers = #tpu.dot_dimension_numbers<[1], [0], [0], [1], [0, 0, 1, 1], [], []>} : vector<16x8xf32>, vector<8x128xf32>, vector<16x128xf32> -> vector<16x128xf32>
    %54 = arith.subf %53, %35 : vector<16x128xf32>
    %55 = math.exp %54 : vector<16x128xf32>
    %56 = arith.addf %51, %55 : vector<16x128xf32>
    %c24_30 = arith.constant 24 : index
    %c0_31 = arith.constant 0 : index
    %57 = vector.load %arg8[%c24_30, %c0_31] : memref<32x128xf32, #tpu.memory_space<vmem>>, vector<8x128xf32>
    %cst_32 = arith.constant dense<0.000000e+00> : vector<16x128xf32>
    %58 = tpu.matmul %3, %57, %cst_32 {dimension_numbers = #tpu.dot_dimension_numbers<[1], [0], [0], [1], [0, 0, 1, 1], [], []>} : vector<16x8xf32>, vector<8x128xf32>, vector<16x128xf32> -> vector<16x128xf32>
    %59 = arith.subf %58, %35 : vector<16x128xf32>
    %60 = math.exp %59 : vector<16x128xf32>
    %61 = arith.addf %56, %60 : vector<16x128xf32>
    %62 = math.log %61 : vector<16x128xf32>
    %63 = arith.addf %35, %62 : vector<16x128xf32>
    %c0_i32_33 = arith.constant 0 : i32
    %64 = vector.broadcast %c0_i32_33 : i32 to vector<16x128xi32>
    %65 = arith.cmpi sge, %6, %64 : vector<16x128xi32>
    %c4_i32 = arith.constant 4 : i32
    %66 = vector.broadcast %c4_i32 : i32 to vector<16x128xi32>
    %67 = arith.cmpi slt, %6, %66 : vector<16x128xi32>
    %68 = arith.andi %65, %67 : vector<16x128xi1>
    %69 = tpu.iota {dimensions = array<i32: 0>} : vector<16x128xi32>
    %c16_i32 = arith.constant 16 : i32
    %70 = arith.muli %arg1, %c16_i32 : i32
    %71 = vector.broadcast %70 : i32 to vector<16x128xi32>
    %72 = arith.addi %69, %71 : vector<16x128xi32>
    %c16_i32_34 = arith.constant 16 : i32
    %73 = vector.broadcast %c16_i32_34 : i32 to vector<16x128xi32>
    %74 = arith.cmpi slt, %72, %73 : vector<16x128xi32>
    %75 = arith.andi %68, %74 : vector<16x128xi1>
    %76 = arith.subf %63, %40 : vector<16x128xf32>
    %cst_35 = arith.constant 0.000000e+00 : f32
    %77 = vector.broadcast %cst_35 : f32 to vector<16x128xf32>
    %78 = arith.select %75, %76, %77 : vector<16x128xi1>, vector<16x128xf32>
    %c0_36 = arith.constant 0 : index
    %c0_37 = arith.constant 0 : index
    %c0_38 = arith.constant 0 : index
    %79 = vector.load %arg6[%c0_36, %c0_37, %c0_38] : memref<1x1x1xf32, #tpu.memory_space<vmem>>, vector<1x1x1xf32>
    %80 = vector.shape_cast %78 : vector<16x128xf32> to vector<1x16x128xf32>
    %cst_39 = arith.constant dense<0.000000e+00> : vector<1xf32>
    %81 = vector.multi_reduction <add>, %80, %cst_39 [1, 2] : vector<1x16x128xf32> to vector<1xf32>
    %82 = vector.shape_cast %81 : vector<1xf32> to vector<1x1x1xf32>
    %83 = vector.extract %82[0, 0, 0] : f32 from vector<1x1x1xf32>
    %84 = vector.broadcast %83 : f32 to vector<1x1x1xf32>
    %85 = arith.addf %79, %84 : vector<1x1x1xf32>
    %c0_40 = arith.constant 0 : index
    %c0_41 = arith.constant 0 : index
    %c0_42 = arith.constant 0 : index
    %86 = vector.load %arg6[%c0_40, %c0_41, %c0_42] : memref<1x1x1xf32, #tpu.memory_space<vmem>>, vector<1x1x1xf32>
    tpu.vector_store %arg6[%c0_40, %c0_41, %c0_42], %85 {strides = array<i32>} : memref<1x1x1xf32, #tpu.memory_space<vmem>>, vector<1x1x1xf32>,
    %c0_43 = arith.constant 0 : index
    %c0_44 = arith.constant 0 : index
    %c0_45 = arith.constant 0 : index
    %87 = vector.load %arg7[%c0_43, %c0_44, %c0_45] : memref<1x1x1xf32, #tpu.memory_space<vmem>>, vector<1x1x1xf32>
    %88 = arith.extui %75 : vector<16x128xi1> to vector<16x128xi32>
    %89 = arith.sitofp %88 : vector<16x128xi32> to vector<16x128xf32>
    %90 = vector.shape_cast %89 : vector<16x128xf32> to vector<1x16x128xf32>
    %cst_46 = arith.constant dense<0.000000e+00> : vector<1xf32>
    %91 = vector.multi_reduction <add>, %90, %cst_46 [1, 2] : vector<1x16x128xf32> to vector<1xf32>
    %92 = vector.shape_cast %91 : vector<1xf32> to vector<1x1x1xf32>
    %93 = vector.extract %92[0, 0, 0] : f32 from vector<1x1x1xf32>
    %94 = vector.broadcast %93 : f32 to vector<1x1x1xf32>
    %95 = arith.addf %87, %94 : vector<1x1x1xf32>
    %c0_47 = arith.constant 0 : index
    %c0_48 = arith.constant 0 : index
    %c0_49 = arith.constant 0 : index
    %96 = vector.load %arg7[%c0_47, %c0_48, %c0_49] : memref<1x1x1xf32, #tpu.memory_space<vmem>>, vector<1x1x1xf32>
    tpu.vector_store %arg7[%c0_47, %c0_48, %c0_49], %95 {strides = array<i32>} : memref<1x1x1xf32, #tpu.memory_space<vmem>>, vector<1x1x1xf32>,
    return
  }
  func.func @transform_0(%arg0: i32, %arg1: i32) -> (i32, i32, i32) {
    %c0_i32 = arith.constant 0 : i32
    %c0_i32_0 = arith.constant 0 : i32
    %c0_i32_1 = arith.constant 0 : i32
    return %arg0, %c0_i32, %c0_i32_0 : i32, i32, i32
  }
  func.func @transform_1(%arg0: i32, %arg1: i32) -> (i32, i32) {
    %c0_i32 = arith.constant 0 : i32
    %c0_i32_0 = arith.constant 0 : i32
    return %arg1, %c0_i32 : i32, i32
  }
  func.func @transform_2(%arg0: i32, %arg1: i32) -> (i32, i32) {
    %c0_i32 = arith.constant 0 : i32
    %c0_i32_0 = arith.constant 0 : i32
    %c0_i32_1 = arith.constant 0 : i32
    return %c0_i32, %c0_i32_0 : i32, i32
  }
  func.func @transform_3(%arg0: i32, %arg1: i32) -> (i32, i32, i32) {
    %c0_i32 = arith.constant 0 : i32
    %c0_i32_0 = arith.constant 0 : i32
    return %arg0, %arg1, %c0_i32 : i32, i32, i32
  }
  func.func @transform_4(%arg0: i32, %arg1: i32) -> (i32, i32, i32) {
    %c0_i32 = arith.constant 0 : i32
    %c0_i32_0 = arith.constant 0 : i32
    %c0_i32_1 = arith.constant 0 : i32
    return %arg0, %c0_i32, %c0_i32_0 : i32, i32, i32
  }
  func.func @transform_5(%arg0: i32, %arg1: i32) -> (i32, i32, i32) {
    %c0_i32 = arith.constant 0 : i32
    %c0_i32_0 = arith.constant 0 : i32
    %c0_i32_1 = arith.constant 0 : i32
    return %arg0, %c0_i32, %c0_i32_0 : i32, i32, i32
  }
}

</mosaic_0001>

<llo_original>
// kernel: tpu_custom_call.1
$region0: #{tpu_custom_call.1}
  #allocation0 [shape = 'u32[]', space=smem, size = 0x4, offset = 0x4, fixed_abs, tag = 'smem constant byte address 0x4 - core index']
  #allocation1 [shape = 'u32[144,128]{1,0:T(1,128)}', space=vmem, size = 0x12000, scoped, tag = 'internal scratch']
  #allocation2 [shape = 'f32[32,128]{1,0:T(8,128)}', space=vmem, size = 0x4000, scoped, tag = 'scratch operand']
  %s0 = inlined_call_operand.vmem [shape: f32[2,32,8], index: 0, kind: input, shape index: {}]
  %s1 = inlined_call_operand.vmem [shape: f32[16,8], index: 1, kind: input, shape index: {}]
  %s2 = inlined_call_operand.vmem [shape: f32[8,128], index: 2, kind: input, shape index: {}]
  %s3 = inlined_call_operand.vmem [shape: s8[2,16,128], index: 3, kind: input, shape index: {}]
  %s4 = inlined_call_operand.vmem [shape: f32[2,1,1], index: 4, kind: output, shape index: {0}]
  %s5 = inlined_call_operand.vmem [shape: f32[2,1,1], index: 5, kind: output, shape index: {1}]
  %6 = xla_tuple %s4, %s5
  %s7 = sld [smem:[#allocation0]]
  $region61: #{tpu_custom_call.1} parent=0
    _
  %s9 = ssub.s32 1, %s7
  %s10 = scalar_select 0, %s9, %s7
  loop: start=0, step=1, limit=4
  $region2: #{tpu_custom_call.1} parent=0 // loop_pre_header
    _
  $region3: #{tpu_custom_call.1} parent=0 // loop_header
    %s12 = sphi 0, %s16
    %p13 = scmp.ge.s32.totalorder %s12, 4
    %s19 = sphi 0, %s31
    %s20 = sphi 0, %s27
    %s21 = sphi 0, %s19
    %s22 = sphi 0, %s20
    %s23 = sphi 0, %s21
    %s24 = sphi 0, %s22
    %s34 = sphi 0, %s36
    %s37 = sphi 0, %s34
    %s38 = sphi 0, %s37
    %s54 = sphi 0, %s38
    %s60 = sphi 0, %s62
    %s63 = sphi 0, %s60
    %s64 = sphi 0, %s63
    %s80 = sphi 0, %s64
    %s84 = sphi 0, %s84
    %s86 = sphi 0, %s84
    %s87 = sphi 0, %s86
    %s101 = sphi 0, %s87
    %s109 = sphi 0, %s111
    %s112 = sphi 0, %s109
    %s113 = sphi 0, %s112
    %s129 = sphi 0, %s113
    %s135 = sphi 0, %s137
    %s138 = sphi 0, %s135
    %s139 = sphi 0, %s138
    %s155 = sphi 0, %s139
    %s161 = sphi 0, %s163
    %s164 = sphi 0, %s161
    %s165 = sphi 0, %s164
    %s181 = sphi 0, %s165
  $region4: #{tpu_custom_call.1} parent=0 // loop_header_branch
    %15 = sbr.rel (%p13) target = $region8
  $region5: #{tpu_custom_call.1} parent=0 // loop_body
    %s17 = ssub.s32 %s12, 1
    %s18 = ssub.s32 %s12, 2
    %s25 = sadd.s32 1, %s20
    %p26 = scmp.ge.s32.totalorder %s25, 1
    %s27 = scalar_select %p26, 0, %s25
    %s28 = sadd.s32 1, %s19
    %s29 = scalar_select %p26, %s28, %s19
    %p30 = scmp.ge.s32.totalorder %s29, 2
    %s31 = scalar_select %p30, 0, %s29
    %s32 = ssub.s32 %s19, %s31
    %p33 = scmp.eq.s32.totalorder %s32, 0
    %s35 = sadd.s32 %s34, 1
    %s36 = scalar_select %p33, %s34, %s35
    %p39 = pneg %p33
    %p40 = scmp.eq.s32.totalorder %s12, 1
    %p41 = por %p39, %p40
    %p42 = scmp.ne.s32.totalorder %s34, %s37
    %p43 = scmp.eq.s32.totalorder %s12, 0
    %p44 = por %p42, %p43
    %p45 = scmp.ne.s32.totalorder %s34, %s37
    %p46 = scmp.eq.s32.totalorder %s17, 1
    %p47 = por %p45, %p46
    %p48 = scmp.ne.s32.totalorder %s37, %s38
    %p49 = scmp.eq.s32.totalorder %s17, 0
    %p50 = por %p48, %p49
    %p51 = scmp.ne.s32.totalorder %s37, %s38
    %p52 = scmp.eq.s32.totalorder %s18, 1
    %p53 = por %p51, %p52
    %p55 = scmp.ne.s32.totalorder %s38, %s54
    %p56 = scmp.eq.s32.totalorder %s18, 0
    %p57 = por %p55, %p56
    %s58 = ssub.s32 %s20, %s27
    %p59 = scmp.eq.s32.totalorder %s58, 0
    %s61 = sadd.s32 %s60, 1
    %s62 = scalar_select %p59, %s60, %s61
    %p65 = pneg %p59
    %p66 = scmp.eq.s32.totalorder %s12, 1
    %p67 = por %p65, %p66
    %p68 = scmp.ne.s32.totalorder %s60, %s63
    %p69 = scmp.eq.s32.totalorder %s12, 0
    %p70 = por %p68, %p69
    %p71 = scmp.ne.s32.totalorder %s60, %s63
    %p72 = scmp.eq.s32.totalorder %s17, 1
    %p73 = por %p71, %p72
    %p74 = scmp.ne.s32.totalorder %s63, %s64
    %p75 = scmp.eq.s32.totalorder %s17, 0
    %p76 = por %p74, %p75
    %p77 = scmp.ne.s32.totalorder %s63, %s64
    %p78 = scmp.eq.s32.totalorder %s18, 1
    %p79 = por %p77, %p78
    %p81 = scmp.ne.s32.totalorder %s64, %s80
    %p82 = scmp.eq.s32.totalorder %s18, 0
    %p83 = por %p81, %p82
    %s85 = sadd.s32 %s84, 1
    %p88 = scmp.eq.s32.totalorder %s12, 1
    %p89 = scmp.ne.s32.totalorder %s84, %s86
    %p90 = scmp.eq.s32.totalorder %s12, 0
    %p91 = por %p89, %p90
    %p92 = scmp.ne.s32.totalorder %s84, %s86
    %p93 = scmp.eq.s32.totalorder %s17, 1
    %p94 = por %p92, %p93
    %p95 = scmp.ne.s32.totalorder %s86, %s87
    %p96 = scmp.eq.s32.totalorder %s17, 0
    %p97 = por %p95, %p96
    %p98 = scmp.ne.s32.totalorder %s86, %s87
    %p99 = scmp.eq.s32.totalorder %s18, 1
    %p100 = por %p98, %p99
    %p102 = scmp.ne.s32.totalorder %s87, %s101
    %p103 = scmp.eq.s32.totalorder %s18, 0
    %p104 = por %p102, %p103
    %s105 = ssub.s32 %s19, %s31
    %s106 = ssub.s32 %s20, %s27
    %s107 = sor.u32 %s105, %s106
    %p108 = scmp.eq.s32.totalorder %s107, 0
    %s110 = sadd.s32 %s109, 1
    %s111 = scalar_select %p108, %s109, %s110
    %p114 = pneg %p108
    %p115 = scmp.eq.s32.totalorder %s12, 1
    %p116 = por %p114, %p115
    %p117 = scmp.ne.s32.totalorder %s109, %s112
    %p118 = scmp.eq.s32.totalorder %s12, 0
    %p119 = por %p117, %p118
    %p120 = scmp.ne.s32.totalorder %s109, %s112
    %p121 = scmp.eq.s32.totalorder %s17, 1
    %p122 = por %p120, %p121
    %p123 = scmp.ne.s32.totalorder %s112, %s113
    %p124 = scmp.eq.s32.totalorder %s17, 0
    %p125 = por %p123, %p124
    %p126 = scmp.ne.s32.totalorder %s112, %s113
    %p127 = scmp.eq.s32.totalorder %s18, 1
    %p128 = por %p126, %p127
    %p130 = scmp.ne.s32.totalorder %s113, %s129
    %p131 = scmp.eq.s32.totalorder %s18, 0
    %p132 = por %p130, %p131
    %s133 = ssub.s32 %s19, %s31
    %p134 = scmp.eq.s32.totalorder %s133, 0
    %s136 = sadd.s32 %s135, 1
    %s137 = scalar_select %p134, %s135, %s136
    %p140 = pneg %p134
    %p141 = scmp.eq.s32.totalorder %s12, 1
    %p142 = por %p140, %p141
    %p143 = scmp.ne.s32.totalorder %s135, %s138
    %p144 = scmp.eq.s32.totalorder %s12, 0
    %p145 = por %p143, %p144
    %p146 = scmp.ne.s32.totalorder %s135, %s138
    %p147 = scmp.eq.s32.totalorder %s17, 1
    %p148 = por %p146, %p147
    %p149 = scmp.ne.s32.totalorder %s138, %s139
    %p150 = scmp.eq.s32.totalorder %s17, 0
    %p151 = por %p149, %p150
    %p152 = scmp.ne.s32.totalorder %s138, %s139
    %p153 = scmp.eq.s32.totalorder %s18, 1
    %p154 = por %p152, %p153
    %p156 = scmp.ne.s32.totalorder %s139, %s155
    %p157 = scmp.eq.s32.totalorder %s18, 0
    %p158 = por %p156, %p157
    %s159 = ssub.s32 %s19, %s31
    %p160 = scmp.eq.s32.totalorder %s159, 0
    %s162 = sadd.s32 %s161, 1
    %s163 = scalar_select %p160, %s161, %s162
    %p166 = pneg %p160
    %p167 = scmp.eq.s32.totalorder %s12, 1
    %p168 = por %p166, %p167
    %p169 = scmp.ne.s32.totalorder %s161, %s164
    %p170 = scmp.eq.s32.totalorder %s12, 0
    %p171 = por %p169, %p170
    %p172 = scmp.ne.s32.totalorder %s161, %s164
    %p173 = scmp.eq.s32.totalorder %s17, 1
    %p174 = por %p172, %p173
    %p175 = scmp.ne.s32.totalorder %s164, %s165
    %p176 = scmp.eq.s32.totalorder %s17, 0
    %p177 = por %p175, %p176
    %p178 = scmp.ne.s32.totalorder %s164, %s165
    %p179 = scmp.eq.s32.totalorder %s18, 1
    %p180 = por %p178, %p179
    %p182 = scmp.ne.s32.totalorder %s165, %s181
    %p183 = scmp.eq.s32.totalorder %s18, 0
    %p184 = por %p182, %p183
    %p185 = scmp.le.s32.totalorder 1, %s12
    %p186 = scmp.lt.s32.totalorder %s12, 3
    %p187 = pnand %p185, %p186
    %p188 = pneg %p187
    // Predicated region
    $region9: #{tpu_custom_call.1} parent=5 // pred_check
      _
    $region10: #{tpu_custom_call.1} parent=5 // pred_check_branch
      %190 = sbr.rel (%p187) target = $region12
    $region11: #{tpu_custom_call.1} parent=5 // pred_region
      %s191 = ssub.s32 %s12, 1
      // Predicated region
      $region13: #{tpu_custom_call.1} parent=11 // pred_check
        %p192 = pneg %p76
      $region14: #{tpu_custom_call.1} parent=11 // pred_check_branch
        %194 = sbr.rel (%p192) target = $region16
      $region15: #{tpu_custom_call.1} parent=11 // pred_region
        %s195 = smul.u32 2, %s22
        %p196 = scmp.lt.s32.totalorder %s195, 1
        %s197 = scalar_select %p196, %s195, 1
        %s198 = smul.addr %s197, 8
        %s199 = scalar_lea.vmem %s1, %s198
        %s200 = smul.u32 2, %s22
      $region16: #{tpu_custom_call.1} parent=11 // pred_fallthru
        _
      // Predicated region
      $region17: #{tpu_custom_call.1} parent=11 // pred_check
        %p201 = pneg %p97
      $region18: #{tpu_custom_call.1} parent=11 // pred_check_branch
        %203 = sbr.rel (%p201) target = $region20
      $region19: #{tpu_custom_call.1} parent=11 // pred_region
        _
      $region20: #{tpu_custom_call.1} parent=11 // pred_fallthru
        _
    $region12: #{tpu_custom_call.1} parent=5 // pred_fallthru
      _
    %p204 = scmp.lt.s32.totalorder %s12, 2
    // Predicated region
    $region21: #{tpu_custom_call.1} parent=5 // pred_check
      %p205 = pneg %p204
    $region22: #{tpu_custom_call.1} parent=5 // pred_check_branch
      %207 = sbr.rel (%p205) target = $region24
    $region23: #{tpu_custom_call.1} parent=5 // pred_region
      // Predicated region
      $region25: #{tpu_custom_call.1} parent=23 // pred_check
        %p208 = pneg %p44
      $region26: #{tpu_custom_call.1} parent=23 // pred_check_branch
        %210 = sbr.rel (%p208) target = $region28
      $region27: #{tpu_custom_call.1} parent=23 // pred_region
        %p211 = scmp.lt.s32.totalorder %s19, 1
        %s212 = scalar_select %p211, %s19, 1
        %s213 = smul.addr %s212, 4
        %s214 = smul.addr %s213, 8
        %s215 = scalar_lea.vmem %s0, %s214
      $region28: #{tpu_custom_call.1} parent=23 // pred_fallthru
        _
      // Predicated region
      $region29: #{tpu_custom_call.1} parent=23 // pred_check
        %p216 = pneg %p119
      $region30: #{tpu_custom_call.1} parent=23 // pred_check_branch
        %218 = sbr.rel (%p216) target = $region32
      $region31: #{tpu_custom_call.1} parent=23 // pred_region
        %s219 = smul.u32 2, %s20
        %p220 = scmp.lt.s32.totalorder %s19, 1
        %s221 = scalar_select %p220, %s19, 1
        %p222 = scmp.lt.s32.totalorder %s219, 1
        %s223 = scalar_select %p222, %s219, 1
        %s224 = smul.addr %s221, 2
        %s225 = sadd.s32 %s223, %s224
        %s226 = smul.addr %s225, 2
        %s227 = scalar_lea.vmem %s3, %s226
        %s228 = smul.u32 2, %s20
      $region32: #{tpu_custom_call.1} parent=23 // pred_fallthru
        _
    $region24: #{tpu_custom_call.1} parent=5 // pred_fallthru
      _
    %p229 = scmp.le.s32.totalorder 1, %s12
    %p230 = scmp.lt.s32.totalorder %s12, 3
    %p231 = pnand %p229, %p230
    %p232 = pneg %p231
    // Predicated region
    $region33: #{tpu_custom_call.1} parent=5 // pred_check
      _
    $region34: #{tpu_custom_call.1} parent=5 // pred_check_branch
      %234 = sbr.rel (%p231) target = $region36
    $region35: #{tpu_custom_call.1} parent=5 // pred_region
      %s235 = ssub.s32 %s12, 1
      %p236 = scmp.lt.s32.totalorder %s21, 1
      %s237 = scalar_select %p236, %s21, 1
      %s238 = smul.addr %s237, 4
      %s239 = smul.addr %s238, 8
      %s240 = scalar_lea.vmem %s0, %s239
      %p241 = pneg %p50
      %p242 = pneg %p47
      %s243 = smul.u32 2, %s22
      %p244 = scmp.lt.s32.totalorder %s243, 1
      %s245 = scalar_select %p244, %s243, 1
      %s246 = smul.addr %s245, 8
      %s247 = scalar_lea.vmem %s1, %s246
      %p248 = pneg %p76
      %p249 = pneg %p73
      %p250 = pneg %p97
      %p251 = pneg %p94
      %s252 = smul.u32 2, %s22
      %p253 = scmp.lt.s32.totalorder %s21, 1
      %s254 = scalar_select %p253, %s21, 1
      %p255 = scmp.lt.s32.totalorder %s252, 1
      %s256 = scalar_select %p255, %s252, 1
      %s257 = smul.addr %s254, 2
      %s258 = sadd.s32 %s256, %s257
      %s259 = smul.addr %s258, 2
      %s260 = scalar_lea.vmem %s3, %s259
      %p261 = pneg %p125
      %p262 = pneg %p122
      %p263 = pneg %p151
      %p264 = pneg %p148
      %p265 = scmp.lt.s32.totalorder %s21, 1
      %s266 = scalar_select %p265, %s21, 1
      %s267 = scalar_lea.vmem %s4, %s266
      %p268 = pneg %p177
      %p269 = pneg %p174
      %p270 = scmp.lt.s32.totalorder %s21, 1
      %s271 = scalar_select %p270, %s21, 1
      %s272 = scalar_lea.vmem %s5, %s271
      %p273 = scmp.lt.s32.totalorder %s21, 1
      %s274 = scalar_select %p273, %s21, 1
      %s275 = smul.addr %s274, 4
      %s276 = smul.addr %s275, 8
      %s277 = scalar_lea.vmem %s0, %s276
      %s278 = smul.u32 2, %s22
      %p279 = scmp.lt.s32.totalorder %s278, 1
      %s280 = scalar_select %p279, %s278, 1
      %s281 = smul.addr %s280, 8
      %s282 = scalar_lea.vmem %s1, %s281
      %s283 = smul.u32 2, %s22
      %s284 = smul.u32 2, %s22
      %p285 = scmp.lt.s32.totalorder %s21, 1
      %s286 = scalar_select %p285, %s21, 1
      %p287 = scmp.lt.s32.totalorder %s284, 1
      %s288 = scalar_select %p287, %s284, 1
      %s289 = smul.addr %s286, 2
      %s290 = sadd.s32 %s288, %s289
      %s291 = smul.addr %s290, 2
      %s292 = scalar_lea.vmem %s3, %s291
      %s293 = smul.u32 2, %s22
      %p294 = scmp.lt.s32.totalorder %s21, 1
      %s295 = scalar_select %p294, %s21, 1
      %s296 = scalar_lea.vmem %s4, %s295
      %p297 = scmp.lt.s32.totalorder %s21, 1
      %s298 = scalar_select %p297, %s21, 1
      %s299 = scalar_lea.vmem %s5, %s298
      %p300 = scmp.eq.s32.totalorder %s22, 0
      // Predicated region
      $region37: #{tpu_custom_call.1} parent=35 // pred_check
        %p301 = pneg %p300
      $region38: #{tpu_custom_call.1} parent=35 // pred_check_branch
        %303 = sbr.rel (%p301) target = $region40
      $region39: #{tpu_custom_call.1} parent=35 // pred_region
        %v304 = vld [vmem:[%s277] sm:$0xff]
        %v305 = vld [vmem:[%s277 + $0x8] sm:$0xff]
        %v306 = vld [vmem:[%s277 + $0x10] sm:$0xff]
        %v307 = vld [vmem:[%s277 + $0x18] sm:$0xff]
        %v308 = vld [vmem:[%s2] sm:$0xff]
        %vm309 = vcmask 64512
        %v311 = vsel %vm309, %v304, 0
        %v314 = vsel %vm309, %v305, 0
        %v317 = vsel %vm309, %v306, 0
        %v320 = vsel %vm309, %v307, 0
        %322 = vmatprep.subr.mxu0 0.0
        %323 = vmatpush1.msra.mxu0 %v308
        %324 = vmatprep.subr.mxu0 0.0
        %325 = vmatpush1.msra.mxu0 0.0
        %326 = vmatprep.subr.mxu0 0.0
        %327 = vmatpush1.msra.mxu0 0.0
        %328 = vmatprep.subr.mxu0 0.0
        %329 = vmatpush1.msra.mxu0 0.0
        %330 = vmatprep.subr.mxu0 0.0
        %331 = vmatpush1.msra.mxu0 0.0
        %332 = vmatprep.subr.mxu0 0.0
        %333 = vmatpush1.msra.mxu0 0.0
        %334 = vmatprep.subr.mxu0 0.0
        %335 = vmatpush1.msra.mxu0 0.0
        %336 = vmatprep.subr.mxu0 0.0
        %337 = vmatpush1.msra.mxu0 0.0
        %338 = vmatprep.subr.mxu0 0.0
        %339 = vmatpush1.msra.mxu0 0.0
        %340 = vmatprep.subr.mxu0 0.0
        %341 = vmatpush1.msra.mxu0 0.0
        %342 = vmatprep.subr.mxu0 0.0
        %343 = vmatpush1.msra.mxu0 0.0
        %344 = vmatprep.subr.mxu0 0.0
        %345 = vmatpush1.msra.mxu0 0.0
        %346 = vmatprep.subr.mxu0 0.0
        %347 = vmatpush1.msra.mxu0 0.0
        %348 = vmatprep.subr.mxu0 0.0
        %349 = vmatpush1.msra.mxu0 0.0
        %350 = vmatprep.subr.mxu0 0.0
        %351 = vmatpush1.msra.mxu0 0.0
        %352 = vmatprep.subr.mxu0 0.0
        %353 = vmatpush1.msra.mxu0 0.0
        %354 = vmatprep.subr.mxu0 0.0
        %355 = vmatpush1.msra.mxu0 0.0
        %356 = vmatprep.subr.mxu0 0.0
        %357 = vmatpush1.msra.mxu0 0.0
        %358 = vmatprep.subr.mxu0 0.0
        %359 = vmatpush1.msra.mxu0 0.0
        %360 = vmatprep.subr.mxu0 0.0
        %361 = vmatpush1.msra.mxu0 0.0
        %362 = vmatprep.subr.mxu0 0.0
        %363 = vmatpush1.msra.mxu0 0.0
        %364 = vmatprep.subr.mxu0 0.0
        %365 = vmatpush1.msra.mxu0 0.0
        %366 = vmatprep.subr.mxu0 0.0
        %367 = vmatpush1.msra.mxu0 0.0
        %368 = vmatprep.subr.mxu0 0.0
        %369 = vmatpush1.msra.mxu0 0.0
        %370 = vmatprep.subr.mxu0 0.0
        %371 = vmatpush1.msra.mxu0 0.0
        %372 = vmatprep.subr.mxu0 0.0
        %373 = vmatpush1.msra.mxu0 0.0
        %374 = vmatprep.subr.mxu0 0.0
        %375 = vmatpush1.msra.mxu0 0.0
        %376 = vmatprep.subr.mxu0 0.0
        %377 = vmatpush1.msra.mxu0 0.0
        %378 = vmatprep.subr.mxu0 0.0
        %379 = vmatpush1.msra.mxu0 0.0
        %380 = vmatprep.subr.mxu0 0.0
        %381 = vmatpush1.msra.mxu0 0.0
        %382 = vmatprep.subr.mxu0 0.0
        %383 = vmatpush1.msra.mxu0 0.0
        %384 = vmatprep.subr.mxu0 0.0
        %385 = vmatpush1.msra.mxu0 0.0
        %386 = vmatprep.mubr.f32.mxu0 0.0
        %387 = vmatmul.mubr.f32.gmra.mrb[0].mxu0 %v311
        %v388 = vpop.f32.mrb[0].mxu0
        %v389 = vadd.f32 0.0, %v388
        %v390 = vpop.f32.mrb[0].mxu0
        %391 = vmatprep.mubr.f32.mxu0 0.0
        %392 = vmatmul.mubr.f32.gmra.mrb[0].mxu0 %v314
        %v393 = vpop.f32.mrb[0].mxu0
        %v394 = vadd.f32 0.0, %v393
        %v395 = vpop.f32.mrb[0].mxu0
        %396 = vmatprep.mubr.f32.mxu0 0.0
        %397 = vmatmul.mubr.f32.gmra.mrb[0].mxu0 %v317
        %v398 = vpop.f32.mrb[0].mxu0
        %v399 = vadd.f32 0.0, %v398
        %v400 = vpop.f32.mrb[0].mxu0
        %401 = vmatprep.mubr.f32.mxu0 0.0
        %402 = vmatmul.mubr.f32.gmra.mrb[0].mxu0 %v320
        %v403 = vpop.f32.mrb[0].mxu0
        %v404 = vadd.f32 0.0, %v403
        %v405 = vpop.f32.mrb[0].mxu0
        %406 = vdwg.mxu0
        %407 = vst [vmem:[#allocation2] sm:$0xff] %v389
        %408 = vst [vmem:[#allocation2 + $0x8] sm:$0xff] %v394
        %409 = vst [vmem:[#allocation2 + $0x10] sm:$0xff] %v399
        %410 = vst [vmem:[#allocation2 + $0x18] sm:$0xff] %v404
        %vm411 = vcmask 0
        %412 = vst.msk [vmem:[%s296] sm:$0x1] %vm411, 0.0
        %413 = vst.msk [vmem:[%s299] sm:$0x1] %vm411, 0.0
      $region40: #{tpu_custom_call.1} parent=35 // pred_fallthru
        _
      %v414 = vld [vmem:[%s282] sm:$0xff]
      %v415 = vld [vmem:[%s282 + $0x8] sm:$0xff]
      %v416 = vld [vmem:[%s292] sm:$0x3]
      %v417 = vld [vmem:[%s292 + $0x2] sm:$0x3]
      %v418 = vunpack.c.0.s8 %v416
      %v419 = vunpack.c.0.s8 %v417
      %v420 = vld [vmem:[#allocation2] sm:$0xff]
      %vm421 = vcmask 64512
      %v423 = vsel %vm421, %v414, 0
      %v426 = vsel %vm421, %v415, 0
      %428 = vmatprep.subr.mxu0 0.0
      %429 = vmatpush1.msra.mxu0 %v420
      %430 = vmatprep.subr.mxu0 0.0
      %431 = vmatpush1.msra.mxu0 0.0
      %432 = vmatprep.subr.mxu0 0.0
      %433 = vmatpush1.msra.mxu0 0.0
      %434 = vmatprep.subr.mxu0 0.0
      %435 = vmatpush1.msra.mxu0 0.0
      %436 = vmatprep.subr.mxu0 0.0
      %437 = vmatpush1.msra.mxu0 0.0
      %438 = vmatprep.subr.mxu0 0.0
      %439 = vmatpush1.msra.mxu0 0.0
      %440 = vmatprep.subr.mxu0 0.0
      %441 = vmatpush1.msra.mxu0 0.0
      %442 = vmatprep.subr.mxu0 0.0
      %443 = vmatpush1.msra.mxu0 0.0
      %444 = vmatprep.subr.mxu0 0.0
      %445 = vmatpush1.msra.mxu0 0.0
      %446 = vmatprep.subr.mxu0 0.0
      %447 = vmatpush1.msra.mxu0 0.0
      %448 = vmatprep.subr.mxu0 0.0
      %449 = vmatpush1.msra.mxu0 0.0
      %450 = vmatprep.subr.mxu0 0.0
      %451 = vmatpush1.msra.mxu0 0.0
      %452 = vmatprep.subr.mxu0 0.0
      %453 = vmatpush1.msra.mxu0 0.0
      %454 = vmatprep.subr.mxu0 0.0
      %455 = vmatpush1.msra.mxu0 0.0
      %456 = vmatprep.subr.mxu0 0.0
      %457 = vmatpush1.msra.mxu0 0.0
      %458 = vmatprep.subr.mxu0 0.0
      %459 = vmatpush1.msra.mxu0 0.0
      %460 = vmatprep.subr.mxu0 0.0
      %461 = vmatpush1.msra.mxu0 0.0
      %462 = vmatprep.subr.mxu0 0.0
      %463 = vmatpush1.msra.mxu0 0.0
      %464 = vmatprep.subr.mxu0 0.0
      %465 = vmatpush1.msra.mxu0 0.0
      %466 = vmatprep.subr.mxu0 0.0
      %467 = vmatpush1.msra.mxu0 0.0
      %468 = vmatprep.subr.mxu0 0.0
      %469 = vmatpush1.msra.mxu0 0.0
      %470 = vmatprep.subr.mxu0 0.0
      %471 = vmatpush1.msra.mxu0 0.0
      %472 = vmatprep.subr.mxu0 0.0
      %473 = vmatpush1.msra.mxu0 0.0
      %474 = vmatprep.subr.mxu0 0.0
      %475 = vmatpush1.msra.mxu0 0.0
      %476 = vmatprep.subr.mxu0 0.0
      %477 = vmatpush1.msra.mxu0 0.0
      %478 = vmatprep.subr.mxu0 0.0
      %479 = vmatpush1.msra.mxu0 0.0
      %480 = vmatprep.subr.mxu0 0.0
      %481 = vmatpush1.msra.mxu0 0.0
      %482 = vmatprep.subr.mxu0 0.0
      %483 = vmatpush1.msra.mxu0 0.0
      %484 = vmatprep.subr.mxu0 0.0
      %485 = vmatpush1.msra.mxu0 0.0
      %486 = vmatprep.subr.mxu0 0.0
      %487 = vmatpush1.msra.mxu0 0.0
      %488 = vmatprep.subr.mxu0 0.0
      %489 = vmatpush1.msra.mxu0 0.0
      %490 = vmatprep.subr.mxu0 0.0
      %491 = vmatpush1.msra.mxu0 0.0
      %492 = vmatprep.mubr.f32.mxu0 0.0
      %493 = vmatmul.mubr.f32.gmra.mrb[0].mxu0 %v423
      %v494 = vpop.f32.mrb[0].mxu0
      %v495 = vadd.f32 0.0, %v494
      %v496 = vpop.f32.mrb[0].mxu0
      %497 = vmatprep.mubr.f32.mxu0 0.0
      %498 = vmatmul.mubr.f32.gmra.mrb[0].mxu0 %v426
      %v499 = vpop.f32.mrb[0].mxu0
      %v500 = vadd.f32 0.0, %v499
      %v501 = vpop.f32.mrb[0].mxu0
      %502 = vdwg.mxu0
      %vm503 = vcmp.eq.s32.totalorder %v418, 0
      %vm504 = vcmp.eq.s32.totalorder %v419, 0
      %v505 = vsel %vm503, %v495, 0.0
      %v506 = vsel %vm504, %v500, 0.0
      %v507 = vadd.f32 %v505, 0.0
      %v508 = vadd.f32 %v506, 0.0
      %v509 = vld [vmem:[#allocation2 + $0x8] sm:$0xff]
      %510 = vmatprep.subr.mxu0 0.0
      %511 = vmatpush1.msra.mxu0 %v509
      %512 = vmatprep.subr.mxu0 0.0
      %513 = vmatpush1.msra.mxu0 0.0
      %514 = vmatprep.subr.mxu0 0.0
      %515 = vmatpush1.msra.mxu0 0.0
      %516 = vmatprep.subr.mxu0 0.0
      %517 = vmatpush1.msra.mxu0 0.0
      %518 = vmatprep.subr.mxu0 0.0
      %519 = vmatpush1.msra.mxu0 0.0
      %520 = vmatprep.subr.mxu0 0.0
      %521 = vmatpush1.msra.mxu0 0.0
      %522 = vmatprep.subr.mxu0 0.0
      %523 = vmatpush1.msra.mxu0 0.0
      %524 = vmatprep.subr.mxu0 0.0
      %525 = vmatpush1.msra.mxu0 0.0
      %526 = vmatprep.subr.mxu0 0.0
      %527 = vmatpush1.msra.mxu0 0.0
      %528 = vmatprep.subr.mxu0 0.0
      %529 = vmatpush1.msra.mxu0 0.0
      %530 = vmatprep.subr.mxu0 0.0
      %531 = vmatpush1.msra.mxu0 0.0
      %532 = vmatprep.subr.mxu0 0.0
      %533 = vmatpush1.msra.mxu0 0.0
      %534 = vmatprep.subr.mxu0 0.0
      %535 = vmatpush1.msra.mxu0 0.0
      %536 = vmatprep.subr.mxu0 0.0
      %537 = vmatpush1.msra.mxu0 0.0
      %538 = vmatprep.subr.mxu0 0.0
      %539 = vmatpush1.msra.mxu0 0.0
      %540 = vmatprep.subr.mxu0 0.0
      %541 = vmatpush1.msra.mxu0 0.0
      %542 = vmatprep.subr.mxu0 0.0
      %543 = vmatpush1.msra.mxu0 0.0
      %544 = vmatprep.subr.mxu0 0.0
      %545 = vmatpush1.msra.mxu0 0.0
      %546 = vmatprep.subr.mxu0 0.0
      %547 = vmatpush1.msra.mxu0 0.0
      %548 = vmatprep.subr.mxu0 0.0
      %549 = vmatpush1.msra.mxu0 0.0
      %550 = vmatprep.subr.mxu0 0.0
      %551 = vmatpush1.msra.mxu0 0.0
      %552 = vmatprep.subr.mxu0 0.0
      %553 = vmatpush1.msra.mxu0 0.0
      %554 = vmatprep.subr.mxu0 0.0
      %555 = vmatpush1.msra.mxu0 0.0
      %556 = vmatprep.subr.mxu0 0.0
      %557 = vmatpush1.msra.mxu0 0.0
      %558 = vmatprep.subr.mxu0 0.0
      %559 = vmatpush1.msra.mxu0 0.0
      %560 = vmatprep.subr.mxu0 0.0
      %561 = vmatpush1.msra.mxu0 0.0
      %562 = vmatprep.subr.mxu0 0.0
      %563 = vmatpush1.msra.mxu0 0.0
      %564 = vmatprep.subr.mxu0 0.0
      %565 = vmatpush1.msra.mxu0 0.0
      %566 = vmatprep.subr.mxu0 0.0
      %567 = vmatpush1.msra.mxu0 0.0
      %568 = vmatprep.subr.mxu0 0.0
      %569 = vmatpush1.msra.mxu0 0.0
      %570 = vmatprep.subr.mxu0 0.0
      %571 = vmatpush1.msra.mxu0 0.0
      %572 = vmatprep.subr.mxu0 0.0
      %573 = vmatpush1.msra.mxu0 0.0
      %574 = vmatprep.mubr.f32.mxu0 0.0
      %575 = vmatmul.mubr.f32.gmra.mrb[0].mxu0 %v423
      %v576 = vpop.f32.mrb[0].mxu0
      %v577 = vadd.f32 0.0, %v576
      %v578 = vpop.f32.mrb[0].mxu0
      %579 = vmatprep.mubr.f32.mxu0 0.0
      %580 = vmatmul.mubr.f32.gmra.mrb[0].mxu0 %v426
      %v581 = vpop.f32.mrb[0].mxu0
      %v582 = vadd.f32 0.0, %v581
      %v583 = vpop.f32.mrb[0].mxu0
      %584 = vdwg.mxu0
      %v585 = vmax.f32 %v495, %v577
      %v586 = vmax.f32 %v500, %v582
      %vm587 = vcmp.eq.s32.totalorder %v418, 1
      %vm588 = vcmp.eq.s32.totalorder %v419, 1
      %v589 = vsel %vm587, %v577, 0.0
      %v590 = vsel %vm588, %v582, 0.0
      %v591 = vadd.f32 %v507, %v589
      %v592 = vadd.f32 %v508, %v590
      %v593 = vld [vmem:[#allocation2 + $0x10] sm:$0xff]
      %594 = vmatprep.subr.mxu0 0.0
      %595 = vmatpush1.msra.mxu0 %v593
      %596 = vmatprep.subr.mxu0 0.0
      %597 = vmatpush1.msra.mxu0 0.0
      %598 = vmatprep.subr.mxu0 0.0
      %599 = vmatpush1.msra.mxu0 0.0
      %600 = vmatprep.subr.mxu0 0.0
      %601 = vmatpush1.msra.mxu0 0.0
      %602 = vmatprep.subr.mxu0 0.0
      %603 = vmatpush1.msra.mxu0 0.0
      %604 = vmatprep.subr.mxu0 0.0
      %605 = vmatpush1.msra.mxu0 0.0
      %606 = vmatprep.subr.mxu0 0.0
      %607 = vmatpush1.msra.mxu0 0.0
      %608 = vmatprep.subr.mxu0 0.0
      %609 = vmatpush1.msra.mxu0 0.0
      %610 = vmatprep.subr.mxu0 0.0
      %611 = vmatpush1.msra.mxu0 0.0
      %612 = vmatprep.subr.mxu0 0.0
      %613 = vmatpush1.msra.mxu0 0.0
      %614 = vmatprep.subr.mxu0 0.0
      %615 = vmatpush1.msra.mxu0 0.0
      %616 = vmatprep.subr.mxu0 0.0
      %617 = vmatpush1.msra.mxu0 0.0
      %618 = vmatprep.subr.mxu0 0.0
      %619 = vmatpush1.msra.mxu0 0.0
      %620 = vmatprep.subr.mxu0 0.0
      %621 = vmatpush1.msra.mxu0 0.0
      %622 = vmatprep.subr.mxu0 0.0
      %623 = vmatpush1.msra.mxu0 0.0
      %624 = vmatprep.subr.mxu0 0.0
      %625 = vmatpush1.msra.mxu0 0.0
      %626 = vmatprep.subr.mxu0 0.0
      %627 = vmatpush1.msra.mxu0 0.0
      %628 = vmatprep.subr.mxu0 0.0
      %629 = vmatpush1.msra.mxu0 0.0
      %630 = vmatprep.subr.mxu0 0.0
      %631 = vmatpush1.msra.mxu0 0.0
      %632 = vmatprep.subr.mxu0 0.0
      %633 = vmatpush1.msra.mxu0 0.0
      %634 = vmatprep.subr.mxu0 0.0
      %635 = vmatpush1.msra.mxu0 0.0
      %636 = vmatprep.subr.mxu0 0.0
      %637 = vmatpush1.msra.mxu0 0.0
      %638 = vmatprep.subr.mxu0 0.0
      %639 = vmatpush1.msra.mxu0 0.0
      %640 = vmatprep.subr.mxu0 0.0
      %641 = vmatpush1.msra.mxu0 0.0
      %642 = vmatprep.subr.mxu0 0.0
      %643 = vmatpush1.msra.mxu0 0.0
      %644 = vmatprep.subr.mxu0 0.0
      %645 = vmatpush1.msra.mxu0 0.0
      %646 = vmatprep.subr.mxu0 0.0
      %647 = vmatpush1.msra.mxu0 0.0
      %648 = vmatprep.subr.mxu0 0.0
      %649 = vmatpush1.msra.mxu0 0.0
      %650 = vmatprep.subr.mxu0 0.0
      %651 = vmatpush1.msra.mxu0 0.0
      %652 = vmatprep.subr.mxu0 0.0
      %653 = vmatpush1.msra.mxu0 0.0
      %654 = vmatprep.subr.mxu0 0.0
      %655 = vmatpush1.msra.mxu0 0.0
      %656 = vmatprep.subr.mxu0 0.0
      %657 = vmatpush1.msra.mxu0 0.0
      %658 = vmatprep.mubr.f32.mxu0 0.0
      %659 = vmatmul.mubr.f32.gmra.mrb[0].mxu0 %v423
      %v660 = vpop.f32.mrb[0].mxu0
      %v661 = vadd.f32 0.0, %v660
      %v662 = vpop.f32.mrb[0].mxu0
      %663 = vmatprep.mubr.f32.mxu0 0.0
      %664 = vmatmul.mubr.f32.gmra.mrb[0].mxu0 %v426
      %v665 = vpop.f32.mrb[0].mxu0
      %v666 = vadd.f32 0.0, %v665
      %v667 = vpop.f32.mrb[0].mxu0
      %668 = vdwg.mxu0
      %v669 = vmax.f32 %v585, %v661
      %v670 = vmax.f32 %v586, %v666
      %vm671 = vcmp.eq.s32.totalorder %v418, 2
      %vm672 = vcmp.eq.s32.totalorder %v419, 2
      %v673 = vsel %vm671, %v661, 0.0
      %v674 = vsel %vm672, %v666, 0.0
      %v675 = vadd.f32 %v591, %v673
      %v676 = vadd.f32 %v592, %v674
      %v677 = vld [vmem:[#allocation2 + $0x18] sm:$0xff]
      %678 = vmatprep.subr.mxu0 0.0
      %679 = vmatpush1.msra.mxu0 %v677
      %680 = vmatprep.subr.mxu0 0.0
      %681 = vmatpush1.msra.mxu0 0.0
      %682 = vmatprep.subr.mxu0 0.0
      %683 = vmatpush1.msra.mxu0 0.0
      %684 = vmatprep.subr.mxu0 0.0
      %685 = vmatpush1.msra.mxu0 0.0
      %686 = vmatprep.subr.mxu0 0.0
      %687 = vmatpush1.msra.mxu0 0.0
      %688 = vmatprep.subr.mxu0 0.0
      %689 = vmatpush1.msra.mxu0 0.0
      %690 = vmatprep.subr.mxu0 0.0
      %691 = vmatpush1.msra.mxu0 0.0
      %692 = vmatprep.subr.mxu0 0.0
      %693 = vmatpush1.msra.mxu0 0.0
      %694 = vmatprep.subr.mxu0 0.0
      %695 = vmatpush1.msra.mxu0 0.0
      %696 = vmatprep.subr.mxu0 0.0
      %697 = vmatpush1.msra.mxu0 0.0
      %698 = vmatprep.subr.mxu0 0.0
      %699 = vmatpush1.msra.mxu0 0.0
      %700 = vmatprep.subr.mxu0 0.0
      %701 = vmatpush1.msra.mxu0 0.0
      %702 = vmatprep.subr.mxu0 0.0
      %703 = vmatpush1.msra.mxu0 0.0
      %704 = vmatprep.subr.mxu0 0.0
      %705 = vmatpush1.msra.mxu0 0.0
      %706 = vmatprep.subr.mxu0 0.0
      %707 = vmatpush1.msra.mxu0 0.0
      %708 = vmatprep.subr.mxu0 0.0
      %709 = vmatpush1.msra.mxu0 0.0
      %710 = vmatprep.subr.mxu0 0.0
      %711 = vmatpush1.msra.mxu0 0.0
      %712 = vmatprep.subr.mxu0 0.0
      %713 = vmatpush1.msra.mxu0 0.0
      %714 = vmatprep.subr.mxu0 0.0
      %715 = vmatpush1.msra.mxu0 0.0
      %716 = vmatprep.subr.mxu0 0.0
      %717 = vmatpush1.msra.mxu0 0.0
      %718 = vmatprep.subr.mxu0 0.0
      %719 = vmatpush1.msra.mxu0 0.0
      %720 = vmatprep.subr.mxu0 0.0
      %721 = vmatpush1.msra.mxu0 0.0
      %722 = vmatprep.subr.mxu0 0.0
      %723 = vmatpush1.msra.mxu0 0.0
      %724 = vmatprep.subr.mxu0 0.0
      %725 = vmatpush1.msra.mxu0 0.0
      %726 = vmatprep.subr.mxu0 0.0
      %727 = vmatpush1.msra.mxu0 0.0
      %728 = vmatprep.subr.mxu0 0.0
      %729 = vmatpush1.msra.mxu0 0.0
      %730 = vmatprep.subr.mxu0 0.0
      %731 = vmatpush1.msra.mxu0 0.0
      %732 = vmatprep.subr.mxu0 0.0
      %733 = vmatpush1.msra.mxu0 0.0
      %734 = vmatprep.subr.mxu0 0.0
      %735 = vmatpush1.msra.mxu0 0.0
      %736 = vmatprep.subr.mxu0 0.0
      %737 = vmatpush1.msra.mxu0 0.0
      %738 = vmatprep.subr.mxu0 0.0
      %739 = vmatpush1.msra.mxu0 0.0
      %740 = vmatprep.subr.mxu0 0.0
      %741 = vmatpush1.msra.mxu0 0.0
      %742 = vmatprep.mubr.f32.mxu0 0.0
      %743 = vmatmul.mubr.f32.gmra.mrb[0].mxu0 %v423
      %v744 = vpop.f32.mrb[0].mxu0
      %v745 = vadd.f32 0.0, %v744
      %v746 = vpop.f32.mrb[0].mxu0
      %747 = vmatprep.mubr.f32.mxu0 0.0
      %748 = vmatmul.mubr.f32.gmra.mrb[0].mxu0 %v426
      %v749 = vpop.f32.mrb[0].mxu0
      %v750 = vadd.f32 0.0, %v749
      %v751 = vpop.f32.mrb[0].mxu0
      %752 = vdwg.mxu0
      %v753 = vmax.f32 %v669, %v745
      %v754 = vmax.f32 %v670, %v750
      %vm755 = vcmp.eq.s32.totalorder %v418, 3
      %vm756 = vcmp.eq.s32.totalorder %v419, 3
      %v757 = vsel %vm755, %v745, 0.0
      %v758 = vsel %vm756, %v750, 0.0
      %v759 = vadd.f32 %v675, %v757
      %v760 = vadd.f32 %v676, %v758
      %v761 = vsub.f32 %v495, %v753
      %v762 = vsub.f32 %v500, %v754
      %v763 = vmul.f32 %v761, 1.442695
      %v764 = vpow.pop %v763
      %v765 = vmul.f32 %v762, 1.442695
      %v766 = vpow.pop %v765
      %v767 = vadd.f32 %v764, 0.0
      %v768 = vadd.f32 %v766, 0.0
      %v769 = vsub.f32 %v577, %v753
      %v770 = vsub.f32 %v582, %v754
      %v771 = vmul.f32 %v769, 1.442695
      %v772 = vpow.pop %v771
      %v773 = vmul.f32 %v770, 1.442695
      %v774 = vpow.pop %v773
      %v775 = vadd.f32 %v767, %v772
      %v776 = vadd.f32 %v768, %v774
      %v777 = vsub.f32 %v661, %v753
      %v778 = vsub.f32 %v666, %v754
      %v779 = vmul.f32 %v777, 1.442695
      %v780 = vpow.pop %v779
      %v781 = vmul.f32 %v778, 1.442695
      %v782 = vpow.pop %v781
      %v783 = vadd.f32 %v775, %v780
      %v784 = vadd.f32 %v776, %v782
      %v785 = vsub.f32 %v745, %v753
      %v786 = vsub.f32 %v750, %v754
      %v787 = vmul.f32 %v785, 1.442695
      %v788 = vpow.pop %v787
      %v789 = vmul.f32 %v786, 1.442695
      %v790 = vpow.pop %v789
      %v791 = vadd.f32 %v783, %v788
      %v792 = vadd.f32 %v784, %v790
      %v793 = vlog2.pop %v791
      %v794 = vmul.f32 %v793, 0.6931472
      %v795 = vlog2.pop %v792
      %v796 = vmul.f32 %v795, 0.6931472
      %v797 = vadd.f32 %v753, %v794
      %v798 = vadd.f32 %v754, %v796
      %vm799 = vcmp.ge.s32.totalorder %v418, 0
      %vm800 = vcmp.ge.s32.totalorder %v419, 0
      %vm801 = vcmp.lt.s32.totalorder %v418, 4
      %vm802 = vcmp.lt.s32.totalorder %v419, 4
      %vm803 = vmand %vm799, %vm801
      %vm804 = vmand %vm800, %vm802
      %v805 = vlaneseq
      %v806 = vshrl.u32 %v805, 7
      %v807 = vadd.s32 %v806, 8
      %s808 = smul.u32 %s22, 16
      %v809 = vstv %s808
      %v810 = vadd.s32 %v806, %v809
      %v811 = vadd.s32 %v807, %v809
      %vm812 = vcmp.lt.s32.totalorder %v810, 16
      %vm813 = vcmp.lt.s32.totalorder %v811, 16
      %vm814 = vmand %vm803, %vm812
      %vm815 = vmand %vm804, %vm813
      %v816 = vsub.f32 %v797, %v759
      %v817 = vsub.f32 %v798, %v760
      %v818 = vsel %vm814, %v816, 0.0
      %v819 = vsel %vm815, %v817, 0.0
      %v820 = vld [vmem:[%s296] sm:$0x1]
      %v821 = vadd.f32 %v818, %v819
      %822 = vadd.xlane.f32.xlu0 %v821
      %v823 = vpop.xlane.xlu0 %822
      %v824 = vrot.slane %v823, 4
      %v825 = vadd.f32 %v823, %v824
      %v826 = vrot.slane %v825, 2
      %v827 = vadd.f32 %v825, %v826
      %v828 = vrot.slane %v827, 1
      %v829 = vadd.f32 %v827, %v828
      %s830 = vtos %v829
      %v831 = vstv %s830
      %v832 = vadd.f32 %v820, %v831
      %vm833 = vcmask 0
      %834 = vst.msk [vmem:[%s296] sm:$0x1] %vm833, %v832
      %v835 = vld [vmem:[%s299] sm:$0x1]
      %v836 = vsel %vm814, 1, 0
      %v837 = vsel %vm815, 1, 0
      %v838 = vcvt.s32.f32 %v836
      %v839 = vcvt.s32.f32 %v837
      %v840 = vadd.f32 %v838, %v839
      %841 = vadd.xlane.f32.xlu0 %v840
      %v842 = vpop.xlane.xlu0 %841
      %v843 = vrot.slane %v842, 4
      %v844 = vadd.f32 %v842, %v843
      %v845 = vrot.slane %v844, 2
      %v846 = vadd.f32 %v844, %v845
      %v847 = vrot.slane %v846, 1
      %v848 = vadd.f32 %v846, %v847
      %s849 = vtos %v848
      %v850 = vstv %s849
      %v851 = vadd.f32 %v835, %v850
      %852 = vst.msk [vmem:[%s299] sm:$0x1] %vm833, %v851
      %p853 = scmp.lt.s32.totalorder %s21, 1
      %s854 = scalar_select %p853, %s21, 1
      %s855 = scalar_lea.vmem %s4, %s854
      %p856 = scmp.lt.s32.totalorder %s21, 1
      %s857 = scalar_select %p856, %s21, 1
      %s858 = scalar_lea.vmem %s5, %s857
      // Predicated region
      $region41: #{tpu_custom_call.1} parent=35 // pred_check
        %p859 = pneg %p148
      $region42: #{tpu_custom_call.1} parent=35 // pred_check_branch
        %861 = sbr.rel (%p859) target = $region44
      $region43: #{tpu_custom_call.1} parent=35 // pred_region
        _
      $region44: #{tpu_custom_call.1} parent=35 // pred_fallthru
        _
      // Predicated region
      $region45: #{tpu_custom_call.1} parent=35 // pred_check
        %p862 = pneg %p174
      $region46: #{tpu_custom_call.1} parent=35 // pred_check_branch
        %864 = sbr.rel (%p862) target = $region48
      $region47: #{tpu_custom_call.1} parent=35 // pred_region
        _
      $region48: #{tpu_custom_call.1} parent=35 // pred_fallthru
        _
    $region36: #{tpu_custom_call.1} parent=5 // pred_fallthru
      _
    %p865 = scmp.le.s32.totalorder 2, %s12
    // Predicated region
    $region49: #{tpu_custom_call.1} parent=5 // pred_check
      %p866 = pneg %p865
    $region50: #{tpu_custom_call.1} parent=5 // pred_check_branch
      %868 = sbr.rel (%p866) target = $region52
    $region51: #{tpu_custom_call.1} parent=5 // pred_region
      %s869 = ssub.s32 %s12, 2
      // Predicated region
      $region53: #{tpu_custom_call.1} parent=51 // pred_check
        %p870 = pneg %p154
      $region54: #{tpu_custom_call.1} parent=51 // pred_check_branch
        %872 = sbr.rel (%p870) target = $region56
      $region55: #{tpu_custom_call.1} parent=51 // pred_region
        %p873 = scmp.lt.s32.totalorder %s23, 1
        %s874 = scalar_select %p873, %s23, 1
        %s875 = scalar_lea.vmem %s4, %s874
      $region56: #{tpu_custom_call.1} parent=51 // pred_fallthru
        _
      // Predicated region
      $region57: #{tpu_custom_call.1} parent=51 // pred_check
        %p876 = pneg %p180
      $region58: #{tpu_custom_call.1} parent=51 // pred_check_branch
        %878 = sbr.rel (%p876) target = $region60
      $region59: #{tpu_custom_call.1} parent=51 // pred_region
        %p879 = scmp.lt.s32.totalorder %s23, 1
        %s880 = scalar_select %p879, %s23, 1
        %s881 = scalar_lea.vmem %s5, %s880
      $region60: #{tpu_custom_call.1} parent=51 // pred_fallthru
        _
    $region52: #{tpu_custom_call.1} parent=5 // pred_fallthru
      _
  $region6: #{tpu_custom_call.1} parent=0 // loop_footer
    %s16 = sadd.s32 1, %s12
  $region7: #{tpu_custom_call.1} parent=0 // loop_footer_branch
    %11 = sbr.rel target = $region3
  $region8: #{tpu_custom_call.1} parent=0 // loop_exit
    _

</llo_original>
